<compile_context>
chip_gen: v5e
topology: v5e:2x2
jax: 0.10.0
libtpu: 0.0.40
codegen_flags: <defaults>
</compile_context>

<pallas_src>
import jax
import jax.numpy as jnp
from jax.experimental import pallas as pl
from jax.experimental.pallas import tpu as pltpu

EPS = 1e-5


def _round_up(x, m):
    return ((x + m - 1) // m) * m


def _batchnorm1d_kernel(x_ref, gamma_ref, beta_ref, o_ref):
    # x_ref: (N, TILE_D); gamma_ref/beta_ref: (1, TILE_D).
    x = x_ref[...].astype(jnp.float32)
    inv_n = jnp.float32(1.0 / x.shape[0])
    mean = jnp.sum(x, axis=0, keepdims=True) * inv_n              # (1, TILE_D)
    mean_sq = jnp.sum(x * x, axis=0, keepdims=True) * inv_n       # (1, TILE_D)
    var = jnp.maximum(mean_sq - mean * mean, 0.0)                 # biased var
    inv_std = jax.lax.rsqrt(var + EPS)                            # EUP slot
    scale = gamma_ref[...].astype(jnp.float32) * inv_std          # (1, TILE_D)
    shift = beta_ref[...].astype(jnp.float32) - mean * scale      # (1, TILE_D)
    # Single mul+add per element; (1, TILE_D) broadcast across sublanes.
    o_ref[...] = (x * scale + shift).astype(o_ref.dtype)


def normalize_batchnorm(x, gamma, beta, *, max_tile_d=1024):
    """BatchNorm1d forward (training-mode batch statistics) via Pallas.

    x:     (N, D)
    gamma: (D,)
    beta:  (D,)
    """
    n, d = x.shape

    # Lane-dense tile width: multiple of 128, at most max_tile_d (and no wider
    # than the 128-padded feature count), shrunk while the in-flight buffers
    # (2 x input + 2 x output (N, tile) f32 blocks) would blow the VMEM budget.
    tile = min(max_tile_d, _round_up(d, 128))
    while tile > 128 and 4 * n * tile * 4 > (40 << 20):
        tile //= 2
    # TODO(synk): for N so large that even (N, 128) tiles exceed VMEM, switch to
    # a two-pass scheme (N-grid sum/sumsq reduction, then apply scale/shift).

    d_pad = _round_up(d, tile)
    if d_pad != d:
        x_p = jnp.pad(x, ((0, 0), (0, d_pad - d)))
        gamma_p = jnp.pad(gamma, (0, d_pad - d), constant_values=1.0)
        beta_p = jnp.pad(beta, (0, d_pad - d))
    else:
        x_p, gamma_p, beta_p = x, gamma, beta

    gamma2 = gamma_p.reshape(1, d_pad)
    beta2 = beta_p.reshape(1, d_pad)

    block_bytes = n * tile * 4
    # 2 input + 2 output buffers of (N, tile) f32 plus gamma/beta + headroom,
    # clamped to the smallest physical VMEM (v7x: 64 MiB).
    vmem_limit = int(min(64 << 20, max(32 << 20, 6 * block_bytes + (2 << 20))))

    grid = (d_pad // tile,)
    out = pl.pallas_call(
        _batchnorm1d_kernel,
        out_shape=jax.ShapeDtypeStruct((n, d_pad), x.dtype),
        grid=grid,
        in_specs=[
            pl.BlockSpec((n, tile), lambda j: (0, j)),
            pl.BlockSpec((1, tile), lambda j: (0, j)),
            pl.BlockSpec((1, tile), lambda j: (0, j)),
        ],
        out_specs=pl.BlockSpec((n, tile), lambda j: (0, j)),
        compiler_params=pltpu.CompilerParams(
            dimension_semantics=("parallel",),
            vmem_limit_bytes=vmem_limit,
        ),
    )(x_p, gamma2, beta2)

    if d_pad != d:
        out = out[:, :d]
    return out


class NormalizePallas:
    """Mirror of the PyTorch Normalize module (norm='batchnorm' path)."""

    def __init__(self, dim=None, norm="batchnorm"):
        self.identity = norm is None or dim is None or norm.lower() == "none"
        self.dim = dim
        if not self.identity:
            assert norm.lower() == "batchnorm", "only batchnorm implemented here"
            # Deterministic parameter init (PyTorch defaults).
            self.gamma = jnp.ones((dim,), jnp.float32)
            self.beta = jnp.zeros((dim,), jnp.float32)
        # TODO(synk): 'layernorm' branch and running_mean/running_var buffer
        # updates (training side effect) are not reproduced here.

    def __call__(self, x):
        if self.identity:
            return x
        return normalize_batchnorm(x, self.gamma, self.beta)


if __name__ == "__main__":
    key = jax.random.PRNGKey(0)
    N, D = 8, 32  # batch=8, hidden=32  (BatchNorm1d(dim=32))
    x = jax.random.normal(key, (N, D), dtype=jnp.float32) * 2.0 + 0.5

    model = NormalizePallas(dim=D, norm="batchnorm")
    y = model(x)
    y = jax.block_until_ready(y)

    # Pure-JAX reference check (training-mode batchnorm, biased variance).
    mean = jnp.mean(x, axis=0, keepdims=True)
    var = jnp.mean((x - mean) ** 2, axis=0, keepdims=True)
    ref = (x - mean) / jnp.sqrt(var + EPS)
    assert y.shape == (N, D), "shape mismatch"
    assert jnp.allclose(y, ref, atol=1e-5, rtol=1e-5), "mismatch vs reference"

    print("KERNEL_OK")
</pallas_src>

<mosaic_0001>
module attributes {stable_mosaic.version = 11 : i64} {
  func.func @_batchnorm1d_kernel(%arg0: i32, %arg1: memref<8x128xf32, #tpu.memory_space<vmem>>, %arg2: memref<1x128xf32, #tpu.memory_space<vmem>>, %arg3: memref<1x128xf32, #tpu.memory_space<vmem>>, %arg4: memref<8x128xf32, #tpu.memory_space<vmem>>) attributes {dimension_semantics = [#tpu.dimension_semantics<parallel>], iteration_bounds = array<i64: 1>, scalar_prefetch = 0 : i64, scratch_operands = 0 : i64, tpu.core_type = #tpu.core_type<tc>, window_params = [{transform_indices = @transform_0, window_bounds = array<i64: 8, 128>}, {transform_indices = @transform_1, window_bounds = array<i64: 1, 128>}, {transform_indices = @transform_2, window_bounds = array<i64: 1, 128>}, {transform_indices = @transform_3, window_bounds = array<i64: 8, 128>}]} {
    %c0 = arith.constant 0 : index
    %c0_0 = arith.constant 0 : index
    %0 = vector.load %arg1[%c0, %c0_0] : memref<8x128xf32, #tpu.memory_space<vmem>>, vector<8x128xf32>
    %cst = arith.constant dense<0.000000e+00> : vector<128xf32>
    %1 = vector.multi_reduction <add>, %0, %cst [0] : vector<8x128xf32> to vector<128xf32>
    %2 = vector.shape_cast %1 : vector<128xf32> to vector<1x128xf32>
    %cst_1 = arith.constant 1.250000e-01 : f32
    %3 = vector.broadcast %cst_1 : f32 to vector<1x128xf32>
    %4 = arith.mulf %2, %3 : vector<1x128xf32>
    %5 = arith.mulf %0, %0 : vector<8x128xf32>
    %cst_2 = arith.constant dense<0.000000e+00> : vector<128xf32>
    %6 = vector.multi_reduction <add>, %5, %cst_2 [0] : vector<8x128xf32> to vector<128xf32>
    %7 = vector.shape_cast %6 : vector<128xf32> to vector<1x128xf32>
    %cst_3 = arith.constant 1.250000e-01 : f32
    %8 = vector.broadcast %cst_3 : f32 to vector<1x128xf32>
    %9 = arith.mulf %7, %8 : vector<1x128xf32>
    %10 = arith.mulf %4, %4 : vector<1x128xf32>
    %11 = arith.subf %9, %10 : vector<1x128xf32>
    %cst_4 = arith.constant 0.000000e+00 : f32
    %12 = vector.broadcast %cst_4 : f32 to vector<1x128xf32>
    %13 = arith.maximumf %11, %12 : vector<1x128xf32>
    %cst_5 = arith.constant 9.99999974E-6 : f32
    %14 = vector.broadcast %cst_5 : f32 to vector<1x128xf32>
    %15 = arith.addf %13, %14 : vector<1x128xf32>
    %16 = math.rsqrt %15 : vector<1x128xf32>
    %c0_6 = arith.constant 0 : index
    %c0_7 = arith.constant 0 : index
    %17 = vector.load %arg2[%c0_6, %c0_7] : memref<1x128xf32, #tpu.memory_space<vmem>>, vector<1x128xf32>
    %18 = arith.mulf %17, %16 : vector<1x128xf32>
    %c0_8 = arith.constant 0 : index
    %c0_9 = arith.constant 0 : index
    %19 = vector.load %arg3[%c0_8, %c0_9] : memref<1x128xf32, #tpu.memory_space<vmem>>, vector<1x128xf32>
    %20 = arith.mulf %4, %18 : vector<1x128xf32>
    %21 = arith.subf %19, %20 : vector<1x128xf32>
    %22 = vector.broadcast %18 : vector<1x128xf32> to vector<8x128xf32>
    %23 = arith.mulf %0, %22 : vector<8x128xf32>
    %24 = vector.broadcast %21 : vector<1x128xf32> to vector<8x128xf32>
    %25 = arith.addf %23, %24 : vector<8x128xf32>
    %c0_10 = arith.constant 0 : index
    %c0_11 = arith.constant 0 : index
    %26 = vector.load %arg4[%c0_10, %c0_11] : memref<8x128xf32, #tpu.memory_space<vmem>>, vector<8x128xf32>
    tpu.vector_store %arg4[%c0_10, %c0_11], %25 {strides = array<i32>} : memref<8x128xf32, #tpu.memory_space<vmem>>, vector<8x128xf32>,
    return
  }
  func.func @transform_0(%arg0: i32) -> (i32, i32) {
    %c0_i32 = arith.constant 0 : i32
    %c0_i32_0 = arith.constant 0 : i32
    return %c0_i32, %arg0 : i32, i32
  }
  func.func @transform_1(%arg0: i32) -> (i32, i32) {
    %c0_i32 = arith.constant 0 : i32
    %c0_i32_0 = arith.constant 0 : i32
    return %c0_i32, %arg0 : i32, i32
  }
  func.func @transform_2(%arg0: i32) -> (i32, i32) {
    %c0_i32 = arith.constant 0 : i32
    %c0_i32_0 = arith.constant 0 : i32
    return %c0_i32, %arg0 : i32, i32
  }
  func.func @transform_3(%arg0: i32) -> (i32, i32) {
    %c0_i32 = arith.constant 0 : i32
    %c0_i32_0 = arith.constant 0 : i32
    return %c0_i32, %arg0 : i32, i32
  }
}

</mosaic_0001>

<llo_original>
// kernel: tpu_custom_call.1
$region0: #{tpu_custom_call.1}
  #allocation0 [shape = 'u32[]', space=smem, size = 0x4, offset = 0x4, fixed_abs, tag = 'smem constant byte address 0x4 - core index']
  #allocation1 [shape = 'u32[72,128]{1,0:T(1,128)}', space=vmem, size = 0x9000, scoped, tag = 'internal scratch']
  %s0 = inlined_call_operand.hbm [shape: f32[8,128], index: 0, kind: input, shape index: {}]
  %s1 = inlined_call_operand.hbm [shape: f32[1,128], index: 1, kind: input, shape index: {}]
  %s2 = inlined_call_operand.vmem [shape: f32[1,128], index: 2, kind: input, shape index: {}]
  %s3 = inlined_call_operand.hbm [shape: f32[8,128], index: 3, kind: output, shape index: {}]
  %s4 = sld [smem:[#allocation0]]
  $region30: #{tpu_custom_call.1} parent=0
    _
  %s6 = ssub.s32 1, %s4
  %s7 = scalar_select 0, %s6, %s4
  $region1: #{tpu_custom_call.1} parent=0
    #allocation2 [shape = 'u8[4096]{0}', space=vmem, size = 0x1000, scoped, tag = 'input window, operand 0, single buffered']
    #allocation3 [shape = 's32[1]{0}', space=sflag, size = 0x4, scoped, tag = 'scoped memory for tpu_custom_call.1']
    #allocation4 [shape = 's32[1]{0}', space=sflag, size = 0x4, scoped, tag = 'scoped memory for tpu_custom_call.1']
    #allocation5 [shape = 'u8[512]{0}', space=vmem, size = 0x400, scoped, tag = 'input window, operand 1, single buffered']
    #allocation6 [shape = 's32[1]{0}', space=sflag, size = 0x4, scoped, tag = 'scoped memory for tpu_custom_call.1']
    #allocation7 [shape = 'u8[4096]{0}', space=vmem, size = 0x1000, scoped, tag = 'output window, operand 0, single buffered']
    %8 = vsyncpa [#allocation3], 0
    %9 = vsyncpa [#allocation6], 0
    %10 = vsyncpa [#allocation4], 0
    // Predicated region
    $region2: #{tpu_custom_call.1} parent=1 // pred_check
      _
    $region3: #{tpu_custom_call.1} parent=1 // pred_check_branch
      %12 = sbr.rel (0) target = $region5
    $region4: #{tpu_custom_call.1} parent=1 // pred_region
      %14 = vsyncadd [#allocation3], 0
      %s16 = sshll.u32 %s0, 4
      %s17 = int_to_ptr.hbm [resolvable:$true] %s16
      %s18 = sshll.u32 [#allocation2], 4
      %s19 = int_to_ptr.vmem [resolvable:$true] %s18
      %21 = dma.hbm_to_vmem [thread:$0]  %s17, 128, %s19, [#allocation3]
    $region5: #{tpu_custom_call.1} parent=1 // pred_fallthru
      _
    // Predicated region
    $region6: #{tpu_custom_call.1} parent=1 // pred_check
      _
    $region7: #{tpu_custom_call.1} parent=1 // pred_check_branch
      %23 = sbr.rel (0) target = $region9
    $region8: #{tpu_custom_call.1} parent=1 // pred_region
      %25 = vsyncadd [#allocation6], 0
      %s27 = sshll.u32 %s1, 4
      %s28 = int_to_ptr.hbm [resolvable:$true] %s27
      %s29 = sshll.u32 [#allocation5], 4
      %s30 = int_to_ptr.vmem [resolvable:$true] %s29
      %32 = dma.hbm_to_vmem [thread:$0]  %s28, 16, %s30, [#allocation6]
    $region9: #{tpu_custom_call.1} parent=1 // pred_fallthru
      _
    // Predicated region
    $region10: #{tpu_custom_call.1} parent=1 // pred_check
      _
    $region11: #{tpu_custom_call.1} parent=1 // pred_check_branch
      %34 = sbr.rel (0) target = $region13
    $region12: #{tpu_custom_call.1} parent=1 // pred_region
      _
    $region13: #{tpu_custom_call.1} parent=1 // pred_fallthru
      _
    // Predicated region
    $region14: #{tpu_custom_call.1} parent=1 // pred_check
      _
    $region15: #{tpu_custom_call.1} parent=1 // pred_check_branch
      %36 = sbr.rel (0) target = $region17
    $region16: #{tpu_custom_call.1} parent=1 // pred_region
      %38 = dma.done [#allocation3], 128
    $region17: #{tpu_custom_call.1} parent=1 // pred_fallthru
      _
    // Predicated region
    $region18: #{tpu_custom_call.1} parent=1 // pred_check
      _
    $region19: #{tpu_custom_call.1} parent=1 // pred_check_branch
      %40 = sbr.rel (0) target = $region21
    $region20: #{tpu_custom_call.1} parent=1 // pred_region
      %42 = dma.done [#allocation6], 16
    $region21: #{tpu_custom_call.1} parent=1 // pred_fallthru
      _
    %v43 = vld [vmem:[#allocation2] sm:$0xff]
    %v44 = vrot.slane %v43, 4
    %v45 = vadd.f32 %v43, %v44
    %v46 = vrot.slane %v45, 2
    %v47 = vadd.f32 %v45, %v46
    %v48 = vrot.slane %v47, 1
    %v49 = vadd.f32 %v47, %v48
    %v50 = vmul.f32 %v49, 0.125
    %v51 = vmul.f32 %v43, %v43
    %v52 = vrot.slane %v51, 4
    %v53 = vadd.f32 %v51, %v52
    %v54 = vrot.slane %v53, 2
    %v55 = vadd.f32 %v53, %v54
    %v56 = vrot.slane %v55, 1
    %v57 = vadd.f32 %v55, %v56
    %v58 = vmul.f32 %v57, 0.125
    %v59 = vmul.f32 %v50, %v50
    %v60 = vsub.f32 %v58, %v59
    %v61 = vmax.f32 %v60, 0.0
    %v62 = vadd.f32 %v61, 1e-05
    %v63 = vrsqrt.pop %v62
    %v64 = vmul.f32 %v63, %v62
    %v65 = vmul.f32 %v64, %v63
    %v66 = vmul.f32 0.5, %v65
    %v67 = vsub.f32 1.5, %v66
    %v68 = vmul.f32 %v63, %v67
    %vm69 = vweird.f32 %v62
    %vm70 = vweird.f32 %v63
    %vm71 = vmor %vm69, %vm70
    %v72 = vsel %vm71, %v63, %v68
    %v73 = vld [vmem:[#allocation5] sm:$0x1]
    %v74 = vmul.f32 %v73, %v72
    %v75 = vld [vmem:[%s2] sm:$0x1]
    %v76 = vmul.f32 %v50, %v74
    %v77 = vsub.f32 %v75, %v76
    %v79 = vperm.slane %v74, 0
    %v81 = vmul.f32 %v43, %v79
    %v83 = vperm.slane %v77, 0
    %v85 = vadd.f32 %v81, %v83
    %86 = vst [vmem:[#allocation7] sm:$0xff] %v85
    // Predicated region
    $region22: #{tpu_custom_call.1} parent=1 // pred_check
      _
    $region23: #{tpu_custom_call.1} parent=1 // pred_check_branch
      %88 = sbr.rel (0) target = $region25
    $region24: #{tpu_custom_call.1} parent=1 // pred_region
      %90 = vsyncadd [#allocation4], 0
      %s92 = sshll.u32 [#allocation7], 4
      %s93 = int_to_ptr.vmem [resolvable:$true] %s92
      %s94 = sshll.u32 %s3, 4
      %s95 = int_to_ptr.hbm [resolvable:$true] %s94
      %97 = dma.vmem_to_hbm [thread:$0]  %s93, 128, %s95, [#allocation4]
    $region25: #{tpu_custom_call.1} parent=1 // pred_fallthru
      _
    // Predicated region
    $region26: #{tpu_custom_call.1} parent=1 // pred_check
      _
    $region27: #{tpu_custom_call.1} parent=1 // pred_check_branch
      %99 = sbr.rel (0) target = $region29
    $region28: #{tpu_custom_call.1} parent=1 // pred_region
      %101 = dma.done [#allocation4], 128
    $region29: #{tpu_custom_call.1} parent=1 // pred_fallthru
      _
    %102 = vsyncpa [#allocation3], 1
    %103 = vsyncpa [#allocation6], 1
    %104 = vsyncpa [#allocation4], 1

</llo_original>
